<compile_context>
chip_gen: v7x
topology: tpu7x:2x2x1
jax: 0.10.0
libtpu: 0.0.40
codegen_flags: <defaults>
</compile_context>

<pallas_src>
import functools

import jax
import jax.numpy as jnp
from jax.experimental import pallas as pl
from jax.experimental.pallas import tpu as pltpu


def lstm_kernel(x_ref, h0_ref, wi_ref, wh_ref, wo_ref,
                cls_ref, hout_ref, *, seq_len, batch, hidden_size):
    H = hidden_size

    # Hoisted input projection: one bf16 (seq*batch, Kpad) @ (Kpad, 4H) MXU
    # call with f32 accumulation.  The ones-column in x picks up the bi row of
    # wi_ref, so no separate bias add is needed.
    gates_x = jnp.dot(x_ref[...], wi_ref[...],
                      preferred_element_type=jnp.float32)      # (seq*batch, 4H) f32

    wh = wh_ref[...]                                           # (H, 4H) bf16
    h = h0_ref[...]                                            # (batch, H) f32
    c = h                                                      # c0 = h0 (module semantics)

    # Fully unrolled recurrence; only the h @ Wh matmul is on the serial path.
    for t in range(seq_len):
        gates = (gates_x[t * batch:(t + 1) * batch, :]
                 + jnp.dot(h.astype(jnp.bfloat16), wh,
                           preferred_element_type=jnp.float32))  # (batch, 4H) f32

        # Single full-tile transcendental pass (EUP).  The cell-gate columns
        # were pre-scaled by 2 in the wrapper, so tanh(x) = 2*sigmoid(2x) - 1.
        sig = jax.nn.sigmoid(gates)

        in_gate = sig[:, 0 * H:1 * H]
        forget_gate = sig[:, 1 * H:2 * H]
        cell_gate = 2.0 * sig[:, 2 * H:3 * H] - 1.0
        out_gate = sig[:, 3 * H:4 * H]

        c = c * forget_gate + in_gate * cell_gate
        h = out_gate * jnp.tanh(c)

    # Final projection + softmax(dim=1).  bo lives in row H of wo_ref.
    wo = wo_ref[0:H, :]
    bo = wo_ref[H:H + 1, :]
    logits = jnp.dot(h, wo, preferred_element_type=jnp.float32) + bo
    m = jnp.max(logits, axis=1, keepdims=True)
    e = jnp.exp(logits - m)
    inv_denom = pl.reciprocal(jnp.sum(e, axis=1, keepdims=True), approx=True)
    cls_ref[...] = (e * inv_denom).astype(cls_ref.dtype)
    hout_ref[...] = h.astype(hout_ref.dtype)


def lstm_forward(x, h0, Wi, Wh, bi, Wo, bo):
    seq_len, batch, embed = x.shape
    hidden = Wh.shape[0]
    out_dim = Wo.shape[1]
    H = hidden

    # ---- one-time parameter prep (in a real model this is amortized) -------
    # tanh(x) = 2*sigmoid(2x) - 1  ->  pre-scale the cell-gate columns by 2.
    scale = jnp.ones((4 * H,), jnp.float32).at[2 * H:3 * H].set(2.0)
    Wi_s = Wi * scale
    Wh_s = (Wh * scale).astype(jnp.bfloat16)
    bi_s = bi * scale

    # Fold bi into Wi via a ones-column on x; pad K to a sublane multiple.
    k_pad = ((embed + 1 + 7) // 8) * 8
    x_flat = x.reshape(seq_len * batch, embed)
    x_aug = jnp.zeros((seq_len * batch, k_pad), jnp.bfloat16)
    x_aug = x_aug.at[:, :embed].set(x_flat.astype(jnp.bfloat16))
    x_aug = x_aug.at[:, embed].set(jnp.bfloat16(1.0))

    Wi_aug = jnp.zeros((k_pad, 4 * H), jnp.bfloat16)
    Wi_aug = Wi_aug.at[:embed, :].set(Wi_s.astype(jnp.bfloat16))
    Wi_aug = Wi_aug.at[embed, :].set(bi_s.astype(jnp.bfloat16))

    # Fold bo into Wo as an extra (sublane-aligned) row; kept f32 (one-off,
    # off the serial chain, preserves softmax accuracy).
    r_pad = ((H + 1 + 7) // 8) * 8
    Wo_aug = jnp.zeros((r_pad, out_dim), jnp.float32)
    Wo_aug = Wo_aug.at[:H, :].set(Wo)
    Wo_aug = Wo_aug.at[H, :].set(bo)
    # ------------------------------------------------------------------------

    kernel = functools.partial(lstm_kernel, seq_len=seq_len, batch=batch,
                               hidden_size=hidden)
    vmem = pl.BlockSpec(memory_space=pltpu.MemorySpace.VMEM)

    return pl.pallas_call(
        kernel,
        out_shape=(
            jax.ShapeDtypeStruct((batch, out_dim), jnp.float32),  # class_output
            jax.ShapeDtypeStruct((batch, hidden), jnp.float32),   # h_T
        ),
        in_specs=[vmem] * 5,
        out_specs=(vmem, vmem),
    )(x_aug, h0.astype(jnp.float32), Wi_aug, Wh_s, Wo_aug)


def reference_forward(x, h0, Wi, Wh, bi, Wo, bo):
    """Pure-JAX f32 mirror of the PyTorch forward, for a correctness check."""
    h_t = h0
    c_t = h0
    H = Wh.shape[0]
    for i in range(x.shape[0]):
        gates = x[i] @ Wi + h_t @ Wh + bi
        ig = jax.nn.sigmoid(gates[:, 0 * H:1 * H])
        fg = jax.nn.sigmoid(gates[:, 1 * H:2 * H])
        cg = jnp.tanh(gates[:, 2 * H:3 * H])
        og = jax.nn.sigmoid(gates[:, 3 * H:4 * H])
        c_t = c_t * fg + ig * cg
        h_t = og * jnp.tanh(c_t)
    logits = h_t @ Wo + bo
    return jax.nn.softmax(logits, axis=1), h_t


if __name__ == "__main__":
    seq_len, batch = 8, 8
    input_size, hidden_size, output_size = 32, 32, 16

    key = jax.random.PRNGKey(0)
    k = jax.random.split(key, 8)
    stdv = 1.0 / hidden_size ** 0.5

    Wi = jax.random.uniform(k[0], (input_size, 4 * hidden_size),
                            jnp.float32, -stdv, stdv)
    Wh = jax.random.uniform(k[1], (hidden_size, 4 * hidden_size),
                            jnp.float32, -stdv, stdv)
    Wo = jax.random.uniform(k[2], (hidden_size, output_size),
                            jnp.float32, -stdv, stdv)
    bi = jax.random.uniform(k[3], (4 * hidden_size,), jnp.float32, -stdv, stdv)
    # bh exists as a parameter in the module but is never used in forward.
    bo = jax.random.uniform(k[5], (output_size,), jnp.float32, -stdv, stdv)

    x = jax.random.normal(k[6], (seq_len, batch, input_size), jnp.float32)
    h0 = jnp.zeros((batch, hidden_size), jnp.float32)

    lstm_fn = jax.jit(lstm_forward)
    cls_out, h_out = lstm_fn(x, h0, Wi, Wh, bi, Wo, bo)
    jax.block_until_ready((cls_out, h_out))

    # f32 reference; tolerance widened to cover the bf16 MXU operands and the
    # approx-reciprocal softmax divide (both intentional, per the perf review).
    cls_ref, h_ref = reference_forward(x, h0, Wi, Wh, bi, Wo, bo)
    assert jnp.allclose(cls_out, cls_ref, atol=2.5e-2, rtol=2.5e-2), (
        float(jnp.max(jnp.abs(cls_out - cls_ref))))
    assert jnp.allclose(h_out, h_ref, atol=2.5e-2, rtol=2.5e-2), (
        float(jnp.max(jnp.abs(h_out - h_ref))))

    print("KERNEL_OK")
</pallas_src>

<mosaic_0001>
module attributes {stable_mosaic.version = 11 : i64} {
  func.func @lstm_kernel(%arg0: memref<64x40xbf16, #tpu.memory_space<vmem>>, %arg1: memref<8x32xf32, #tpu.memory_space<vmem>>, %arg2: memref<40x128xbf16, #tpu.memory_space<vmem>>, %arg3: memref<32x128xbf16, #tpu.memory_space<vmem>>, %arg4: memref<40x16xf32, #tpu.memory_space<vmem>>, %arg5: memref<8x16xf32, #tpu.memory_space<vmem>>, %arg6: memref<8x32xf32, #tpu.memory_space<vmem>>) attributes {dimension_semantics = [], scalar_prefetch = 0 : i64, scratch_operands = 0 : i64, tpu.core_type = #tpu.core_type<tc>} {
    %c0 = arith.constant 0 : index
    %c0_0 = arith.constant 0 : index
    %0 = vector.load %arg0[%c0, %c0_0] : memref<64x40xbf16, #tpu.memory_space<vmem>>, vector<64x40xbf16>
    %c0_1 = arith.constant 0 : index
    %c0_2 = arith.constant 0 : index
    %1 = vector.load %arg2[%c0_1, %c0_2] : memref<40x128xbf16, #tpu.memory_space<vmem>>, vector<40x128xbf16>
    %cst = arith.constant dense<0.000000e+00> : vector<64x128xf32>
    %2 = tpu.matmul %0, %1, %cst {dimension_numbers = #tpu.dot_dimension_numbers<[1], [0], [0], [1], [0, 0, 1, 1], [], []>} : vector<64x40xbf16>, vector<40x128xbf16>, vector<64x128xf32> -> vector<64x128xf32>
    %c0_3 = arith.constant 0 : index
    %c0_4 = arith.constant 0 : index
    %3 = vector.load %arg3[%c0_3, %c0_4] : memref<32x128xbf16, #tpu.memory_space<vmem>>, vector<32x128xbf16>
    %c0_5 = arith.constant 0 : index
    %c0_6 = arith.constant 0 : index
    %4 = vector.load %arg1[%c0_5, %c0_6] : memref<8x32xf32, #tpu.memory_space<vmem>>, vector<8x32xf32>
    %5 = vector.extract_strided_slice %2 {offsets = [0, 0], sizes = [8, 128], strides = [1, 1]} : vector<64x128xf32> to vector<8x128xf32>
    %6 = arith.truncf %4 : vector<8x32xf32> to vector<8x32xbf16>
    %cst_7 = arith.constant dense<0.000000e+00> : vector<8x128xf32>
    %7 = tpu.matmul %6, %3, %cst_7 {dimension_numbers = #tpu.dot_dimension_numbers<[1], [0], [0], [1], [0, 0, 1, 1], [], []>} : vector<8x32xbf16>, vector<32x128xbf16>, vector<8x128xf32> -> vector<8x128xf32>
    %8 = arith.addf %5, %7 : vector<8x128xf32>
    %9 = arith.negf %8 : vector<8x128xf32>
    %10 = math.exp %9 : vector<8x128xf32>
    %cst_8 = arith.constant 1.000000e+00 : f32
    %11 = vector.broadcast %cst_8 : f32 to vector<8x128xf32>
    %12 = arith.addf %11, %10 : vector<8x128xf32>
    %13 = arith.divf %11, %12 : vector<8x128xf32>
    %14 = vector.extract_strided_slice %13 {offsets = [0, 0], sizes = [8, 32], strides = [1, 1]} : vector<8x128xf32> to vector<8x32xf32>
    %15 = vector.extract_strided_slice %13 {offsets = [0, 32], sizes = [8, 32], strides = [1, 1]} : vector<8x128xf32> to vector<8x32xf32>
    %16 = vector.extract_strided_slice %13 {offsets = [0, 64], sizes = [8, 32], strides = [1, 1]} : vector<8x128xf32> to vector<8x32xf32>
    %cst_9 = arith.constant 2.000000e+00 : f32
    %17 = vector.broadcast %cst_9 : f32 to vector<8x32xf32>
    %18 = arith.mulf %17, %16 : vector<8x32xf32>
    %cst_10 = arith.constant 1.000000e+00 : f32
    %19 = vector.broadcast %cst_10 : f32 to vector<8x32xf32>
    %20 = arith.subf %18, %19 : vector<8x32xf32>
    %21 = vector.extract_strided_slice %13 {offsets = [0, 96], sizes = [8, 32], strides = [1, 1]} : vector<8x128xf32> to vector<8x32xf32>
    %22 = arith.mulf %4, %15 : vector<8x32xf32>
    %23 = arith.mulf %14, %20 : vector<8x32xf32>
    %24 = arith.addf %22, %23 : vector<8x32xf32>
    %25 = math.tanh %24 : vector<8x32xf32>
    %26 = arith.mulf %21, %25 : vector<8x32xf32>
    %27 = vector.extract_strided_slice %2 {offsets = [8, 0], sizes = [8, 128], strides = [1, 1]} : vector<64x128xf32> to vector<8x128xf32>
    %28 = arith.truncf %26 : vector<8x32xf32> to vector<8x32xbf16>
    %cst_11 = arith.constant dense<0.000000e+00> : vector<8x128xf32>
    %29 = tpu.matmul %28, %3, %cst_11 {dimension_numbers = #tpu.dot_dimension_numbers<[1], [0], [0], [1], [0, 0, 1, 1], [], []>} : vector<8x32xbf16>, vector<32x128xbf16>, vector<8x128xf32> -> vector<8x128xf32>
    %30 = arith.addf %27, %29 : vector<8x128xf32>
    %31 = arith.negf %30 : vector<8x128xf32>
    %32 = math.exp %31 : vector<8x128xf32>
    %cst_12 = arith.constant 1.000000e+00 : f32
    %33 = vector.broadcast %cst_12 : f32 to vector<8x128xf32>
    %34 = arith.addf %33, %32 : vector<8x128xf32>
    %35 = arith.divf %33, %34 : vector<8x128xf32>
    %36 = vector.extract_strided_slice %35 {offsets = [0, 0], sizes = [8, 32], strides = [1, 1]} : vector<8x128xf32> to vector<8x32xf32>
    %37 = vector.extract_strided_slice %35 {offsets = [0, 32], sizes = [8, 32], strides = [1, 1]} : vector<8x128xf32> to vector<8x32xf32>
    %38 = vector.extract_strided_slice %35 {offsets = [0, 64], sizes = [8, 32], strides = [1, 1]} : vector<8x128xf32> to vector<8x32xf32>
    %cst_13 = arith.constant 2.000000e+00 : f32
    %39 = vector.broadcast %cst_13 : f32 to vector<8x32xf32>
    %40 = arith.mulf %39, %38 : vector<8x32xf32>
    %cst_14 = arith.constant 1.000000e+00 : f32
    %41 = vector.broadcast %cst_14 : f32 to vector<8x32xf32>
    %42 = arith.subf %40, %41 : vector<8x32xf32>
    %43 = vector.extract_strided_slice %35 {offsets = [0, 96], sizes = [8, 32], strides = [1, 1]} : vector<8x128xf32> to vector<8x32xf32>
    %44 = arith.mulf %24, %37 : vector<8x32xf32>
    %45 = arith.mulf %36, %42 : vector<8x32xf32>
    %46 = arith.addf %44, %45 : vector<8x32xf32>
    %47 = math.tanh %46 : vector<8x32xf32>
    %48 = arith.mulf %43, %47 : vector<8x32xf32>
    %49 = vector.extract_strided_slice %2 {offsets = [16, 0], sizes = [8, 128], strides = [1, 1]} : vector<64x128xf32> to vector<8x128xf32>
    %50 = arith.truncf %48 : vector<8x32xf32> to vector<8x32xbf16>
    %cst_15 = arith.constant dense<0.000000e+00> : vector<8x128xf32>
    %51 = tpu.matmul %50, %3, %cst_15 {dimension_numbers = #tpu.dot_dimension_numbers<[1], [0], [0], [1], [0, 0, 1, 1], [], []>} : vector<8x32xbf16>, vector<32x128xbf16>, vector<8x128xf32> -> vector<8x128xf32>
    %52 = arith.addf %49, %51 : vector<8x128xf32>
    %53 = arith.negf %52 : vector<8x128xf32>
    %54 = math.exp %53 : vector<8x128xf32>
    %cst_16 = arith.constant 1.000000e+00 : f32
    %55 = vector.broadcast %cst_16 : f32 to vector<8x128xf32>
    %56 = arith.addf %55, %54 : vector<8x128xf32>
    %57 = arith.divf %55, %56 : vector<8x128xf32>
    %58 = vector.extract_strided_slice %57 {offsets = [0, 0], sizes = [8, 32], strides = [1, 1]} : vector<8x128xf32> to vector<8x32xf32>
    %59 = vector.extract_strided_slice %57 {offsets = [0, 32], sizes = [8, 32], strides = [1, 1]} : vector<8x128xf32> to vector<8x32xf32>
    %60 = vector.extract_strided_slice %57 {offsets = [0, 64], sizes = [8, 32], strides = [1, 1]} : vector<8x128xf32> to vector<8x32xf32>
    %cst_17 = arith.constant 2.000000e+00 : f32
    %61 = vector.broadcast %cst_17 : f32 to vector<8x32xf32>
    %62 = arith.mulf %61, %60 : vector<8x32xf32>
    %cst_18 = arith.constant 1.000000e+00 : f32
    %63 = vector.broadcast %cst_18 : f32 to vector<8x32xf32>
    %64 = arith.subf %62, %63 : vector<8x32xf32>
    %65 = vector.extract_strided_slice %57 {offsets = [0, 96], sizes = [8, 32], strides = [1, 1]} : vector<8x128xf32> to vector<8x32xf32>
    %66 = arith.mulf %46, %59 : vector<8x32xf32>
    %67 = arith.mulf %58, %64 : vector<8x32xf32>
    %68 = arith.addf %66, %67 : vector<8x32xf32>
    %69 = math.tanh %68 : vector<8x32xf32>
    %70 = arith.mulf %65, %69 : vector<8x32xf32>
    %71 = vector.extract_strided_slice %2 {offsets = [24, 0], sizes = [8, 128], strides = [1, 1]} : vector<64x128xf32> to vector<8x128xf32>
    %72 = arith.truncf %70 : vector<8x32xf32> to vector<8x32xbf16>
    %cst_19 = arith.constant dense<0.000000e+00> : vector<8x128xf32>
    %73 = tpu.matmul %72, %3, %cst_19 {dimension_numbers = #tpu.dot_dimension_numbers<[1], [0], [0], [1], [0, 0, 1, 1], [], []>} : vector<8x32xbf16>, vector<32x128xbf16>, vector<8x128xf32> -> vector<8x128xf32>
    %74 = arith.addf %71, %73 : vector<8x128xf32>
    %75 = arith.negf %74 : vector<8x128xf32>
    %76 = math.exp %75 : vector<8x128xf32>
    %cst_20 = arith.constant 1.000000e+00 : f32
    %77 = vector.broadcast %cst_20 : f32 to vector<8x128xf32>
    %78 = arith.addf %77, %76 : vector<8x128xf32>
    %79 = arith.divf %77, %78 : vector<8x128xf32>
    %80 = vector.extract_strided_slice %79 {offsets = [0, 0], sizes = [8, 32], strides = [1, 1]} : vector<8x128xf32> to vector<8x32xf32>
    %81 = vector.extract_strided_slice %79 {offsets = [0, 32], sizes = [8, 32], strides = [1, 1]} : vector<8x128xf32> to vector<8x32xf32>
    %82 = vector.extract_strided_slice %79 {offsets = [0, 64], sizes = [8, 32], strides = [1, 1]} : vector<8x128xf32> to vector<8x32xf32>
    %cst_21 = arith.constant 2.000000e+00 : f32
    %83 = vector.broadcast %cst_21 : f32 to vector<8x32xf32>
    %84 = arith.mulf %83, %82 : vector<8x32xf32>
    %cst_22 = arith.constant 1.000000e+00 : f32
    %85 = vector.broadcast %cst_22 : f32 to vector<8x32xf32>
    %86 = arith.subf %84, %85 : vector<8x32xf32>
    %87 = vector.extract_strided_slice %79 {offsets = [0, 96], sizes = [8, 32], strides = [1, 1]} : vector<8x128xf32> to vector<8x32xf32>
    %88 = arith.mulf %68, %81 : vector<8x32xf32>
    %89 = arith.mulf %80, %86 : vector<8x32xf32>
    %90 = arith.addf %88, %89 : vector<8x32xf32>
    %91 = math.tanh %90 : vector<8x32xf32>
    %92 = arith.mulf %87, %91 : vector<8x32xf32>
    %93 = vector.extract_strided_slice %2 {offsets = [32, 0], sizes = [8, 128], strides = [1, 1]} : vector<64x128xf32> to vector<8x128xf32>
    %94 = arith.truncf %92 : vector<8x32xf32> to vector<8x32xbf16>
    %cst_23 = arith.constant dense<0.000000e+00> : vector<8x128xf32>
    %95 = tpu.matmul %94, %3, %cst_23 {dimension_numbers = #tpu.dot_dimension_numbers<[1], [0], [0], [1], [0, 0, 1, 1], [], []>} : vector<8x32xbf16>, vector<32x128xbf16>, vector<8x128xf32> -> vector<8x128xf32>
    %96 = arith.addf %93, %95 : vector<8x128xf32>
    %97 = arith.negf %96 : vector<8x128xf32>
    %98 = math.exp %97 : vector<8x128xf32>
    %cst_24 = arith.constant 1.000000e+00 : f32
    %99 = vector.broadcast %cst_24 : f32 to vector<8x128xf32>
    %100 = arith.addf %99, %98 : vector<8x128xf32>
    %101 = arith.divf %99, %100 : vector<8x128xf32>
    %102 = vector.extract_strided_slice %101 {offsets = [0, 0], sizes = [8, 32], strides = [1, 1]} : vector<8x128xf32> to vector<8x32xf32>
    %103 = vector.extract_strided_slice %101 {offsets = [0, 32], sizes = [8, 32], strides = [1, 1]} : vector<8x128xf32> to vector<8x32xf32>
    %104 = vector.extract_strided_slice %101 {offsets = [0, 64], sizes = [8, 32], strides = [1, 1]} : vector<8x128xf32> to vector<8x32xf32>
    %cst_25 = arith.constant 2.000000e+00 : f32
    %105 = vector.broadcast %cst_25 : f32 to vector<8x32xf32>
    %106 = arith.mulf %105, %104 : vector<8x32xf32>
    %cst_26 = arith.constant 1.000000e+00 : f32
    %107 = vector.broadcast %cst_26 : f32 to vector<8x32xf32>
    %108 = arith.subf %106, %107 : vector<8x32xf32>
    %109 = vector.extract_strided_slice %101 {offsets = [0, 96], sizes = [8, 32], strides = [1, 1]} : vector<8x128xf32> to vector<8x32xf32>
    %110 = arith.mulf %90, %103 : vector<8x32xf32>
    %111 = arith.mulf %102, %108 : vector<8x32xf32>
    %112 = arith.addf %110, %111 : vector<8x32xf32>
    %113 = math.tanh %112 : vector<8x32xf32>
    %114 = arith.mulf %109, %113 : vector<8x32xf32>
    %115 = vector.extract_strided_slice %2 {offsets = [40, 0], sizes = [8, 128], strides = [1, 1]} : vector<64x128xf32> to vector<8x128xf32>
    %116 = arith.truncf %114 : vector<8x32xf32> to vector<8x32xbf16>
    %cst_27 = arith.constant dense<0.000000e+00> : vector<8x128xf32>
    %117 = tpu.matmul %116, %3, %cst_27 {dimension_numbers = #tpu.dot_dimension_numbers<[1], [0], [0], [1], [0, 0, 1, 1], [], []>} : vector<8x32xbf16>, vector<32x128xbf16>, vector<8x128xf32> -> vector<8x128xf32>
    %118 = arith.addf %115, %117 : vector<8x128xf32>
    %119 = arith.negf %118 : vector<8x128xf32>
    %120 = math.exp %119 : vector<8x128xf32>
    %cst_28 = arith.constant 1.000000e+00 : f32
    %121 = vector.broadcast %cst_28 : f32 to vector<8x128xf32>
    %122 = arith.addf %121, %120 : vector<8x128xf32>
    %123 = arith.divf %121, %122 : vector<8x128xf32>
    %124 = vector.extract_strided_slice %123 {offsets = [0, 0], sizes = [8, 32], strides = [1, 1]} : vector<8x128xf32> to vector<8x32xf32>
    %125 = vector.extract_strided_slice %123 {offsets = [0, 32], sizes = [8, 32], strides = [1, 1]} : vector<8x128xf32> to vector<8x32xf32>
    %126 = vector.extract_strided_slice %123 {offsets = [0, 64], sizes = [8, 32], strides = [1, 1]} : vector<8x128xf32> to vector<8x32xf32>
    %cst_29 = arith.constant 2.000000e+00 : f32
    %127 = vector.broadcast %cst_29 : f32 to vector<8x32xf32>
    %128 = arith.mulf %127, %126 : vector<8x32xf32>
    %cst_30 = arith.constant 1.000000e+00 : f32
    %129 = vector.broadcast %cst_30 : f32 to vector<8x32xf32>
    %130 = arith.subf %128, %129 : vector<8x32xf32>
    %131 = vector.extract_strided_slice %123 {offsets = [0, 96], sizes = [8, 32], strides = [1, 1]} : vector<8x128xf32> to vector<8x32xf32>
    %132 = arith.mulf %112, %125 : vector<8x32xf32>
    %133 = arith.mulf %124, %130 : vector<8x32xf32>
    %134 = arith.addf %132, %133 : vector<8x32xf32>
    %135 = math.tanh %134 : vector<8x32xf32>
    %136 = arith.mulf %131, %135 : vector<8x32xf32>
    %137 = vector.extract_strided_slice %2 {offsets = [48, 0], sizes = [8, 128], strides = [1, 1]} : vector<64x128xf32> to vector<8x128xf32>
    %138 = arith.truncf %136 : vector<8x32xf32> to vector<8x32xbf16>
    %cst_31 = arith.constant dense<0.000000e+00> : vector<8x128xf32>
    %139 = tpu.matmul %138, %3, %cst_31 {dimension_numbers = #tpu.dot_dimension_numbers<[1], [0], [0], [1], [0, 0, 1, 1], [], []>} : vector<8x32xbf16>, vector<32x128xbf16>, vector<8x128xf32> -> vector<8x128xf32>
    %140 = arith.addf %137, %139 : vector<8x128xf32>
    %141 = arith.negf %140 : vector<8x128xf32>
    %142 = math.exp %141 : vector<8x128xf32>
    %cst_32 = arith.constant 1.000000e+00 : f32
    %143 = vector.broadcast %cst_32 : f32 to vector<8x128xf32>
    %144 = arith.addf %143, %142 : vector<8x128xf32>
    %145 = arith.divf %143, %144 : vector<8x128xf32>
    %146 = vector.extract_strided_slice %145 {offsets = [0, 0], sizes = [8, 32], strides = [1, 1]} : vector<8x128xf32> to vector<8x32xf32>
    %147 = vector.extract_strided_slice %145 {offsets = [0, 32], sizes = [8, 32], strides = [1, 1]} : vector<8x128xf32> to vector<8x32xf32>
    %148 = vector.extract_strided_slice %145 {offsets = [0, 64], sizes = [8, 32], strides = [1, 1]} : vector<8x128xf32> to vector<8x32xf32>
    %cst_33 = arith.constant 2.000000e+00 : f32
    %149 = vector.broadcast %cst_33 : f32 to vector<8x32xf32>
    %150 = arith.mulf %149, %148 : vector<8x32xf32>
    %cst_34 = arith.constant 1.000000e+00 : f32
    %151 = vector.broadcast %cst_34 : f32 to vector<8x32xf32>
    %152 = arith.subf %150, %151 : vector<8x32xf32>
    %153 = vector.extract_strided_slice %145 {offsets = [0, 96], sizes = [8, 32], strides = [1, 1]} : vector<8x128xf32> to vector<8x32xf32>
    %154 = arith.mulf %134, %147 : vector<8x32xf32>
    %155 = arith.mulf %146, %152 : vector<8x32xf32>
    %156 = arith.addf %154, %155 : vector<8x32xf32>
    %157 = math.tanh %156 : vector<8x32xf32>
    %158 = arith.mulf %153, %157 : vector<8x32xf32>
    %159 = vector.extract_strided_slice %2 {offsets = [56, 0], sizes = [8, 128], strides = [1, 1]} : vector<64x128xf32> to vector<8x128xf32>
    %160 = arith.truncf %158 : vector<8x32xf32> to vector<8x32xbf16>
    %cst_35 = arith.constant dense<0.000000e+00> : vector<8x128xf32>
    %161 = tpu.matmul %160, %3, %cst_35 {dimension_numbers = #tpu.dot_dimension_numbers<[1], [0], [0], [1], [0, 0, 1, 1], [], []>} : vector<8x32xbf16>, vector<32x128xbf16>, vector<8x128xf32> -> vector<8x128xf32>
    %162 = arith.addf %159, %161 : vector<8x128xf32>
    %163 = arith.negf %162 : vector<8x128xf32>
    %164 = math.exp %163 : vector<8x128xf32>
    %cst_36 = arith.constant 1.000000e+00 : f32
    %165 = vector.broadcast %cst_36 : f32 to vector<8x128xf32>
    %166 = arith.addf %165, %164 : vector<8x128xf32>
    %167 = arith.divf %165, %166 : vector<8x128xf32>
    %168 = vector.extract_strided_slice %167 {offsets = [0, 0], sizes = [8, 32], strides = [1, 1]} : vector<8x128xf32> to vector<8x32xf32>
    %169 = vector.extract_strided_slice %167 {offsets = [0, 32], sizes = [8, 32], strides = [1, 1]} : vector<8x128xf32> to vector<8x32xf32>
    %170 = vector.extract_strided_slice %167 {offsets = [0, 64], sizes = [8, 32], strides = [1, 1]} : vector<8x128xf32> to vector<8x32xf32>
    %cst_37 = arith.constant 2.000000e+00 : f32
    %171 = vector.broadcast %cst_37 : f32 to vector<8x32xf32>
    %172 = arith.mulf %171, %170 : vector<8x32xf32>
    %cst_38 = arith.constant 1.000000e+00 : f32
    %173 = vector.broadcast %cst_38 : f32 to vector<8x32xf32>
    %174 = arith.subf %172, %173 : vector<8x32xf32>
    %175 = vector.extract_strided_slice %167 {offsets = [0, 96], sizes = [8, 32], strides = [1, 1]} : vector<8x128xf32> to vector<8x32xf32>
    %176 = arith.mulf %156, %169 : vector<8x32xf32>
    %177 = arith.mulf %168, %174 : vector<8x32xf32>
    %178 = arith.addf %176, %177 : vector<8x32xf32>
    %179 = math.tanh %178 : vector<8x32xf32>
    %180 = arith.mulf %175, %179 : vector<8x32xf32>
    %c0_39 = arith.constant 0 : index
    %c0_40 = arith.constant 0 : index
    %181 = vector.load %arg4[%c0_39, %c0_40] : memref<40x16xf32, #tpu.memory_space<vmem>>, vector<32x16xf32>
    %c32 = arith.constant 32 : index
    %c0_41 = arith.constant 0 : index
    %182 = vector.load %arg4[%c32, %c0_41] : memref<40x16xf32, #tpu.memory_space<vmem>>, vector<1x16xf32>
    %cst_42 = arith.constant dense<0.000000e+00> : vector<8x16xf32>
    %183 = tpu.matmul %180, %181, %cst_42 {dimension_numbers = #tpu.dot_dimension_numbers<[1], [0], [0], [1], [0, 0, 1, 1], [], []>} : vector<8x32xf32>, vector<32x16xf32>, vector<8x16xf32> -> vector<8x16xf32>
    %184 = vector.broadcast %182 : vector<1x16xf32> to vector<8x16xf32>
    %185 = arith.addf %183, %184 : vector<8x16xf32>
    %cst_43 = arith.constant dense<0xFF800000> : vector<8xf32>
    %186 = vector.multi_reduction <maximumf>, %185, %cst_43 [1] : vector<8x16xf32> to vector<8xf32>
    %187 = vector.shape_cast %186 : vector<8xf32> to vector<8x1xf32>
    %188 = vector.broadcast %187 : vector<8x1xf32> to vector<8x16xf32>
    %189 = arith.subf %185, %188 : vector<8x16xf32>
    %190 = math.exp %189 : vector<8x16xf32>
    %cst_44 = arith.constant dense<0.000000e+00> : vector<8xf32>
    %191 = vector.multi_reduction <add>, %190, %cst_44 [1] : vector<8x16xf32> to vector<8xf32>
    %192 = vector.shape_cast %191 : vector<8xf32> to vector<8x1xf32>
    %193 = tpu.reciprocal %192 {approx = true} : vector<8x1xf32> -> vector<8x1xf32>
    %194 = vector.broadcast %193 : vector<8x1xf32> to vector<8x16xf32>
    %195 = arith.mulf %190, %194 : vector<8x16xf32>
    %c0_45 = arith.constant 0 : index
    %c0_46 = arith.constant 0 : index
    %196 = vector.load %arg5[%c0_45, %c0_46] : memref<8x16xf32, #tpu.memory_space<vmem>>, vector<8x16xf32>
    tpu.vector_store %arg5[%c0_45, %c0_46], %195 {strides = array<i32>} : memref<8x16xf32, #tpu.memory_space<vmem>>, vector<8x16xf32>,
    %c0_47 = arith.constant 0 : index
    %c0_48 = arith.constant 0 : index
    %197 = vector.load %arg6[%c0_47, %c0_48] : memref<8x32xf32, #tpu.memory_space<vmem>>, vector<8x32xf32>
    tpu.vector_store %arg6[%c0_47, %c0_48], %180 {strides = array<i32>} : memref<8x32xf32, #tpu.memory_space<vmem>>, vector<8x32xf32>,
    return
  }
}

</mosaic_0001>

<llo_original>
// kernel: lstm_forward.1
$region0: #{lstm_forward.1}
  #allocation0 [shape = 'u32[]', space=smem, size = 0x4, offset = 0x4, fixed_abs, tag = 'smem constant byte address 0x4 - core index']
  #allocation1 [shape = 'u32[144,128]{1,0:T(1,128)}', space=vmem, size = 0x12000, scoped, tag = 'internal scratch']
  %s0 = inlined_call_operand.vmem [shape: bf16[64,40], index: 0, kind: input, shape index: {}]
  %s1 = inlined_call_operand.vmem [shape: f32[8,32], index: 1, kind: input, shape index: {}]
  %s2 = inlined_call_operand.vmem [shape: bf16[40,128], index: 2, kind: input, shape index: {}]
  %s3 = inlined_call_operand.vmem [shape: bf16[32,128], index: 3, kind: input, shape index: {}]
  %s4 = inlined_call_operand.vmem [shape: f32[40,16], index: 4, kind: input, shape index: {}]
  %s5 = inlined_call_operand.hbm [shape: f32[8,16], index: 5, kind: output, shape index: {0}]
  %s6 = inlined_call_operand.hbm [shape: f32[8,32], index: 6, kind: output, shape index: {1}]
  %7 = xla_tuple %s5, %s6
  %s8 = sld [smem:[#allocation0]]
  $region38: #{lstm_forward.1} parent=0
    _
  %s10 = ssub.s32 1, %s8
  %s11 = scalar_select 0, %s10, %s8
  $region1: #{lstm_forward.1} parent=0
    #allocation2 [shape = 'u8[4096]{0}', space=vmem, size = 0x1000, scoped, tag = 'output window, operand 0, single buffered']
    #allocation3 [shape = 's32[1]{0}', space=sflag, size = 0x4, scoped, tag = 'scoped memory for lstm_forward.1']
    #allocation4 [shape = 'u8[4096]{0}', space=vmem, size = 0x1000, scoped, tag = 'output window, operand 1, single buffered']
    #allocation5 [shape = 's32[1]{0}', space=sflag, size = 0x4, scoped, tag = 'scoped memory for lstm_forward.1']
    %12 = vsyncpa [#allocation3], 0
    %13 = vsyncpa [#allocation5], 0
    // Predicated region
    $region2: #{lstm_forward.1} parent=1 // pred_check
      _
    $region3: #{lstm_forward.1} parent=1 // pred_check_branch
      %15 = sbr.rel (0) target = $region5
    $region4: #{lstm_forward.1} parent=1 // pred_region
      _
    $region5: #{lstm_forward.1} parent=1 // pred_fallthru
      _
    // Predicated region
    $region6: #{lstm_forward.1} parent=1 // pred_check
      _
    $region7: #{lstm_forward.1} parent=1 // pred_check_branch
      %17 = sbr.rel (0) target = $region9
    $region8: #{lstm_forward.1} parent=1 // pred_region
      _
    $region9: #{lstm_forward.1} parent=1 // pred_fallthru
      _
    // Predicated region
    $region10: #{lstm_forward.1} parent=1 // pred_check
      _
    $region11: #{lstm_forward.1} parent=1 // pred_check_branch
      %19 = sbr.rel (0) target = $region13
    $region12: #{lstm_forward.1} parent=1 // pred_region
      _
    $region13: #{lstm_forward.1} parent=1 // pred_fallthru
      _
    // Predicated region
    $region14: #{lstm_forward.1} parent=1 // pred_check
      _
    $region15: #{lstm_forward.1} parent=1 // pred_check_branch
      %21 = sbr.rel (0) target = $region17
    $region16: #{lstm_forward.1} parent=1 // pred_region
      _
    $region17: #{lstm_forward.1} parent=1 // pred_fallthru
      _
    // Predicated region
    $region18: #{lstm_forward.1} parent=1 // pred_check
      _
    $region19: #{lstm_forward.1} parent=1 // pred_check_branch
      %23 = sbr.rel (0) target = $region21
    $region20: #{lstm_forward.1} parent=1 // pred_region
      _
    $region21: #{lstm_forward.1} parent=1 // pred_fallthru
      _
    %v25 = vld [vmem:[%s0] sm:$0xf]
    %v26 = vld [vmem:[%s0 + $0x4] sm:$0xf]
    %v27 = vld [vmem:[%s0 + $0x8] sm:$0xf]
    %v28 = vld [vmem:[%s0 + $0xc] sm:$0xf]
    %v29 = vld [vmem:[%s0 + $0x10] sm:$0xf]
    %v30 = vld [vmem:[%s0 + $0x14] sm:$0xf]
    %v31 = vld [vmem:[%s0 + $0x18] sm:$0xf]
    %v32 = vld [vmem:[%s0 + $0x1c] sm:$0xf]
    %v33 = vld [vmem:[%s2] sm:$0xf]
    %v34 = vld [vmem:[%s2 + $0x4] sm:$0xf]
    %v35 = vld [vmem:[%s2 + $0x8] sm:$0xf]
    %v36 = vld [vmem:[%s2 + $0xc] sm:$0xf]
    %v37 = vld [vmem:[%s2 + $0x10] sm:$0xf]
    %v46 = vunpack.c.l.b16 %v25
    %v47 = vunpack.c.l.b16 %v26
    %v48 = vunpack.c.l.b16 %v27
    %v49 = vunpack.c.l.b16 %v28
    %v50 = vunpack.c.l.b16 %v29
    %v51 = vunpack.c.l.b16 %v30
    %v52 = vunpack.c.l.b16 %v31
    %v53 = vunpack.c.l.b16 %v32
    %v54 = vpack.c.b16 %v47, %v46
    %v55 = vpack.c.b16 %v49, %v48
    %v56 = vpack.c.b16 %v51, %v50
    %v57 = vpack.c.b16 %v53, %v52
    %v63 = vunpack.c.l.b16 %v33
    %v64 = vunpack.c.l.b16 %v34
    %v65 = vunpack.c.l.b16 %v35
    %v66 = vunpack.c.l.b16 %v36
    %v67 = vunpack.c.l.b16 %v37
    %v68 = vpack.c.b16 %v64, %v63
    %v69 = vpack.c.b16 %v66, %v65
    %v70 = vpack.c.b16 %v67, %v67
    %vm73 = vcmask 326656
    %v75 = vsel %vm73, %v54, 0
    %v78 = vsel %vm73, %v55, 0
    %v81 = vsel %vm73, %v56, 0
    %v84 = vsel %vm73, %v57, 0
    %vm86 = vcmask 1043456
    %v88 = vsel %vm86, %v70, 0
    %90 = vmatprep.subr.bf16.mxu0 0
    %91 = vmatpush1.bf16.msra.mxu0 %v68
    %92 = vmatprep.subr.bf16.mxu0 0
    %93 = vmatpush1.bf16.msra.mxu0 %v69
    %94 = vmatprep.subr.bf16.mxu0 0
    %95 = vmatpush1.bf16.msra.mxu0 %v88
    %96 = vmatprep.subr.bf16.mxu0 0
    %97 = vmatpush1.bf16.msra.mxu0 0
    %98 = vmatprep.subr.bf16.mxu0 0
    %99 = vmatpush1.bf16.msra.mxu0 0
    %100 = vmatprep.subr.bf16.mxu0 0
    %101 = vmatpush1.bf16.msra.mxu0 0
    %102 = vmatprep.subr.bf16.mxu0 0
    %103 = vmatpush1.bf16.msra.mxu0 0
    %104 = vmatprep.subr.bf16.mxu0 0
    %105 = vmatpush1.bf16.msra.mxu0 0
    %106 = vmatprep.subr.bf16.mxu0 0
    %107 = vmatpush1.bf16.msra.mxu0 0
    %108 = vmatprep.subr.bf16.mxu0 0
    %109 = vmatpush1.bf16.msra.mxu0 0
    %110 = vmatprep.subr.bf16.mxu0 0
    %111 = vmatpush1.bf16.msra.mxu0 0
    %112 = vmatprep.subr.bf16.mxu0 0
    %113 = vmatpush1.bf16.msra.mxu0 0
    %114 = vmatprep.subr.bf16.mxu0 0
    %115 = vmatpush1.bf16.msra.mxu0 0
    %116 = vmatprep.subr.bf16.mxu0 0
    %117 = vmatpush1.bf16.msra.mxu0 0
    %118 = vmatprep.subr.bf16.mxu0 0
    %119 = vmatpush1.bf16.msra.mxu0 0
    %120 = vmatprep.subr.bf16.mxu0 0
    %121 = vmatpush1.bf16.msra.mxu0 0
    %122 = vmatprep.mubr.bf16.mxu0 0
    %123 = vmatmul.mubr.bf16.gmra.mrb[0].mxu0 %v75
    %v124 = vpop.f32.mrb[0].mxu0
    %v125 = vadd.f32 0.0, %v124
    %v126 = vpop.f32.mrb[0].mxu0
    %v127 = vpop.f32.mrb[0].mxu0
    %v128 = vadd.f32 0.0, %v127
    %v129 = vpop.f32.mrb[0].mxu0
    %130 = vmatprep.mubr.bf16.mxu0 0
    %131 = vmatmul.mubr.bf16.gmra.mrb[0].mxu0 %v78
    %v132 = vpop.f32.mrb[0].mxu0
    %v133 = vadd.f32 0.0, %v132
    %v134 = vpop.f32.mrb[0].mxu0
    %v135 = vpop.f32.mrb[0].mxu0
    %v136 = vadd.f32 0.0, %v135
    %v137 = vpop.f32.mrb[0].mxu0
    %138 = vmatprep.mubr.bf16.mxu0 0
    %139 = vmatmul.mubr.bf16.gmra.mrb[0].mxu0 %v81
    %v140 = vpop.f32.mrb[0].mxu0
    %v141 = vadd.f32 0.0, %v140
    %v142 = vpop.f32.mrb[0].mxu0
    %v143 = vpop.f32.mrb[0].mxu0
    %v144 = vadd.f32 0.0, %v143
    %v145 = vpop.f32.mrb[0].mxu0
    %146 = vmatprep.mubr.bf16.mxu0 0
    %147 = vmatmul.mubr.bf16.gmra.mrb[0].mxu0 %v84
    %v148 = vpop.f32.mrb[0].mxu0
    %v149 = vadd.f32 0.0, %v148
    %v150 = vpop.f32.mrb[0].mxu0
    %v151 = vpop.f32.mrb[0].mxu0
    %v152 = vadd.f32 0.0, %v151
    %v153 = vpop.f32.mrb[0].mxu0
    %154 = vdwg.mxu0
    %v155 = vld [vmem:[%s3] sm:$0xf]
    %v156 = vld [vmem:[%s3 + $0x4] sm:$0xf]
    %v157 = vld [vmem:[%s3 + $0x8] sm:$0xf]
    %v158 = vld [vmem:[%s3 + $0xc] sm:$0xf]
    %v159 = vld [vmem:[%s1] sm:$0xff]
    %v160 = vpack.c.bf16 %v159, %v159
    %v165 = vunpack.c.l.b16 %v155
    %v166 = vunpack.c.l.b16 %v156
    %v167 = vunpack.c.l.b16 %v157
    %v168 = vunpack.c.l.b16 %v158
    %v169 = vpack.c.b16 %v166, %v165
    %v170 = vpack.c.b16 %v168, %v167
    %vm173 = vcmask 261120
    %v175 = vsel %vm173, %v160, 0
    %177 = vmatprep.subr.bf16.mxu0 0
    %178 = vmatpush1.bf16.msra.mxu0 %v169
    %179 = vmatprep.subr.bf16.mxu0 0
    %180 = vmatpush1.bf16.msra.mxu0 %v170
    %181 = vmatprep.subr.bf16.mxu0 0
    %182 = vmatpush1.bf16.msra.mxu0 0
    %183 = vmatprep.subr.bf16.mxu0 0
    %184 = vmatpush1.bf16.msra.mxu0 0
    %185 = vmatprep.subr.bf16.mxu0 0
    %186 = vmatpush1.bf16.msra.mxu0 0
    %187 = vmatprep.subr.bf16.mxu0 0
    %188 = vmatpush1.bf16.msra.mxu0 0
    %189 = vmatprep.subr.bf16.mxu0 0
    %190 = vmatpush1.bf16.msra.mxu0 0
    %191 = vmatprep.subr.bf16.mxu0 0
    %192 = vmatpush1.bf16.msra.mxu0 0
    %193 = vmatprep.subr.bf16.mxu0 0
    %194 = vmatpush1.bf16.msra.mxu0 0
    %195 = vmatprep.subr.bf16.mxu0 0
    %196 = vmatpush1.bf16.msra.mxu0 0
    %197 = vmatprep.subr.bf16.mxu0 0
    %198 = vmatpush1.bf16.msra.mxu0 0
    %199 = vmatprep.subr.bf16.mxu0 0
    %200 = vmatpush1.bf16.msra.mxu0 0
    %201 = vmatprep.subr.bf16.mxu0 0
    %202 = vmatpush1.bf16.msra.mxu0 0
    %203 = vmatprep.subr.bf16.mxu0 0
    %204 = vmatpush1.bf16.msra.mxu0 0
    %205 = vmatprep.subr.bf16.mxu0 0
    %206 = vmatpush1.bf16.msra.mxu0 0
    %207 = vmatprep.subr.bf16.mxu0 0
    %208 = vmatpush1.bf16.msra.mxu0 0
    %209 = vmatprep.mubr.bf16.mxu0 0
    %210 = vmatmul.mubr.bf16.gmra.mrb[0].mxu0 %v175
    %v211 = vpop.f32.mrb[0].mxu0
    %v212 = vadd.f32 0.0, %v211
    %v213 = vpop.f32.mrb[0].mxu0
    %v214 = vpop.f32.mrb[0].mxu0
    %v215 = vpop.f32.mrb[0].mxu0
    %216 = vdwg.mxu0
    %v217 = vadd.f32 %v125, %v212
    %v218 = vxor.u32 %v217, 2147483648
    %v219 = vmul.f32 %v218, 1.442695
    %v220 = vpow.pop %v219
    %v221 = vadd.f32 %v220, 1.0
    %v222 = vrcp.pop %v221
    %v223 = vmul.f32 1.0, %v222
    %v224 = vmul.f32 %v223, 2.0
    %v225 = vsub.f32 %v224, 1.0
    %227 = vrot.lane.b32.xlu0 %v223, 96
    %v228 = vpop.permute.xlu0 %227
    %v230 = vmul.f32 %v159, %v228
    %232 = vrot.lane.b32.xlu0 %v225, 64
    %v233 = vpop.permute.xlu0 %232
    %v235 = vmul.f32 %v223, %v233
    %v236 = vadd.f32 %v230, %v235
    %v237 = vtanh.pop %v236
    %239 = vrot.lane.b32.xlu0 %v237, 96
    %v240 = vpop.permute.xlu0 %239
    %v242 = vmul.f32 %v223, %v240
    %v243 = vpack.c.bf16 %v242, %v242
    %245 = vrot.lane.b32.xlu0 %v243, 32
    %v246 = vpop.permute.xlu0 %245
    %v248 = vsel %vm173, %v246, 0
    %250 = vmatprep.subr.bf16.mxu0 0
    %251 = vmatpush1.bf16.msra.mxu0 %v169
    %252 = vmatprep.subr.bf16.mxu0 0
    %253 = vmatpush1.bf16.msra.mxu0 %v170
    %254 = vmatprep.subr.bf16.mxu0 0
    %255 = vmatpush1.bf16.msra.mxu0 0
    %256 = vmatprep.subr.bf16.mxu0 0
    %257 = vmatpush1.bf16.msra.mxu0 0
    %258 = vmatprep.subr.bf16.mxu0 0
    %259 = vmatpush1.bf16.msra.mxu0 0
    %260 = vmatprep.subr.bf16.mxu0 0
    %261 = vmatpush1.bf16.msra.mxu0 0
    %262 = vmatprep.subr.bf16.mxu0 0
    %263 = vmatpush1.bf16.msra.mxu0 0
    %264 = vmatprep.subr.bf16.mxu0 0
    %265 = vmatpush1.bf16.msra.mxu0 0
    %266 = vmatprep.subr.bf16.mxu0 0
    %267 = vmatpush1.bf16.msra.mxu0 0
    %268 = vmatprep.subr.bf16.mxu0 0
    %269 = vmatpush1.bf16.msra.mxu0 0
    %270 = vmatprep.subr.bf16.mxu0 0
    %271 = vmatpush1.bf16.msra.mxu0 0
    %272 = vmatprep.subr.bf16.mxu0 0
    %273 = vmatpush1.bf16.msra.mxu0 0
    %274 = vmatprep.subr.bf16.mxu0 0
    %275 = vmatpush1.bf16.msra.mxu0 0
    %276 = vmatprep.subr.bf16.mxu0 0
    %277 = vmatpush1.bf16.msra.mxu0 0
    %278 = vmatprep.subr.bf16.mxu0 0
    %279 = vmatpush1.bf16.msra.mxu0 0
    %280 = vmatprep.subr.bf16.mxu0 0
    %281 = vmatpush1.bf16.msra.mxu0 0
    %282 = vmatprep.mubr.bf16.mxu0 0
    %283 = vmatmul.mubr.bf16.gmra.mrb[0].mxu0 %v248
    %v284 = vpop.f32.mrb[0].mxu0
    %v285 = vadd.f32 0.0, %v284
    %v286 = vpop.f32.mrb[0].mxu0
    %v287 = vpop.f32.mrb[0].mxu0
    %v288 = vpop.f32.mrb[0].mxu0
    %289 = vdwg.mxu0
    %v290 = vadd.f32 %v128, %v285
    %v291 = vxor.u32 %v290, 2147483648
    %v292 = vmul.f32 %v291, 1.442695
    %v293 = vpow.pop %v292
    %v294 = vadd.f32 %v293, 1.0
    %v295 = vrcp.pop %v294
    %v296 = vmul.f32 1.0, %v295
    %v297 = vmul.f32 %v296, 2.0
    %v298 = vsub.f32 %v297, 1.0
    %300 = vrot.lane.b32.xlu0 %v296, 96
    %v301 = vpop.permute.xlu0 %300
    %v303 = vmul.f32 %v236, %v301
    %305 = vrot.lane.b32.xlu0 %v298, 64
    %v306 = vpop.permute.xlu0 %305
    %v308 = vmul.f32 %v296, %v306
    %v309 = vadd.f32 %v303, %v308
    %v310 = vtanh.pop %v309
    %312 = vrot.lane.b32.xlu0 %v310, 96
    %v313 = vpop.permute.xlu0 %312
    %v315 = vmul.f32 %v296, %v313
    %v316 = vpack.c.bf16 %v315, %v315
    %318 = vrot.lane.b32.xlu0 %v316, 32
    %v319 = vpop.permute.xlu0 %318
    %v321 = vsel %vm173, %v319, 0
    %323 = vmatprep.subr.bf16.mxu0 0
    %324 = vmatpush1.bf16.msra.mxu0 %v169
    %325 = vmatprep.subr.bf16.mxu0 0
    %326 = vmatpush1.bf16.msra.mxu0 %v170
    %327 = vmatprep.subr.bf16.mxu0 0
    %328 = vmatpush1.bf16.msra.mxu0 0
    %329 = vmatprep.subr.bf16.mxu0 0
    %330 = vmatpush1.bf16.msra.mxu0 0
    %331 = vmatprep.subr.bf16.mxu0 0
    %332 = vmatpush1.bf16.msra.mxu0 0
    %333 = vmatprep.subr.bf16.mxu0 0
    %334 = vmatpush1.bf16.msra.mxu0 0
    %335 = vmatprep.subr.bf16.mxu0 0
    %336 = vmatpush1.bf16.msra.mxu0 0
    %337 = vmatprep.subr.bf16.mxu0 0
    %338 = vmatpush1.bf16.msra.mxu0 0
    %339 = vmatprep.subr.bf16.mxu0 0
    %340 = vmatpush1.bf16.msra.mxu0 0
    %341 = vmatprep.subr.bf16.mxu0 0
    %342 = vmatpush1.bf16.msra.mxu0 0
    %343 = vmatprep.subr.bf16.mxu0 0
    %344 = vmatpush1.bf16.msra.mxu0 0
    %345 = vmatprep.subr.bf16.mxu0 0
    %346 = vmatpush1.bf16.msra.mxu0 0
    %347 = vmatprep.subr.bf16.mxu0 0
    %348 = vmatpush1.bf16.msra.mxu0 0
    %349 = vmatprep.subr.bf16.mxu0 0
    %350 = vmatpush1.bf16.msra.mxu0 0
    %351 = vmatprep.subr.bf16.mxu0 0
    %352 = vmatpush1.bf16.msra.mxu0 0
    %353 = vmatprep.subr.bf16.mxu0 0
    %354 = vmatpush1.bf16.msra.mxu0 0
    %355 = vmatprep.mubr.bf16.mxu0 0
    %356 = vmatmul.mubr.bf16.gmra.mrb[0].mxu0 %v321
    %v357 = vpop.f32.mrb[0].mxu0
    %v358 = vadd.f32 0.0, %v357
    %v359 = vpop.f32.mrb[0].mxu0
    %v360 = vpop.f32.mrb[0].mxu0
    %v361 = vpop.f32.mrb[0].mxu0
    %362 = vdwg.mxu0
    %v363 = vadd.f32 %v133, %v358
    %v364 = vxor.u32 %v363, 2147483648
    %v365 = vmul.f32 %v364, 1.442695
    %v366 = vpow.pop %v365
    %v367 = vadd.f32 %v366, 1.0
    %v368 = vrcp.pop %v367
    %v369 = vmul.f32 1.0, %v368
    %v370 = vmul.f32 %v369, 2.0
    %v371 = vsub.f32 %v370, 1.0
    %373 = vrot.lane.b32.xlu0 %v369, 96
    %v374 = vpop.permute.xlu0 %373
    %v376 = vmul.f32 %v309, %v374
    %378 = vrot.lane.b32.xlu0 %v371, 64
    %v379 = vpop.permute.xlu0 %378
    %v381 = vmul.f32 %v369, %v379
    %v382 = vadd.f32 %v376, %v381
    %v383 = vtanh.pop %v382
    %385 = vrot.lane.b32.xlu0 %v383, 96
    %v386 = vpop.permute.xlu0 %385
    %v388 = vmul.f32 %v369, %v386
    %v389 = vpack.c.bf16 %v388, %v388
    %391 = vrot.lane.b32.xlu0 %v389, 32
    %v392 = vpop.permute.xlu0 %391
    %v394 = vsel %vm173, %v392, 0
    %396 = vmatprep.subr.bf16.mxu0 0
    %397 = vmatpush1.bf16.msra.mxu0 %v169
    %398 = vmatprep.subr.bf16.mxu0 0
    %399 = vmatpush1.bf16.msra.mxu0 %v170
    %400 = vmatprep.subr.bf16.mxu0 0
    %401 = vmatpush1.bf16.msra.mxu0 0
    %402 = vmatprep.subr.bf16.mxu0 0
    %403 = vmatpush1.bf16.msra.mxu0 0
    %404 = vmatprep.subr.bf16.mxu0 0
    %405 = vmatpush1.bf16.msra.mxu0 0
    %406 = vmatprep.subr.bf16.mxu0 0
    %407 = vmatpush1.bf16.msra.mxu0 0
    %408 = vmatprep.subr.bf16.mxu0 0
    %409 = vmatpush1.bf16.msra.mxu0 0
    %410 = vmatprep.subr.bf16.mxu0 0
    %411 = vmatpush1.bf16.msra.mxu0 0
    %412 = vmatprep.subr.bf16.mxu0 0
    %413 = vmatpush1.bf16.msra.mxu0 0
    %414 = vmatprep.subr.bf16.mxu0 0
    %415 = vmatpush1.bf16.msra.mxu0 0
    %416 = vmatprep.subr.bf16.mxu0 0
    %417 = vmatpush1.bf16.msra.mxu0 0
    %418 = vmatprep.subr.bf16.mxu0 0
    %419 = vmatpush1.bf16.msra.mxu0 0
    %420 = vmatprep.subr.bf16.mxu0 0
    %421 = vmatpush1.bf16.msra.mxu0 0
    %422 = vmatprep.subr.bf16.mxu0 0
    %423 = vmatpush1.bf16.msra.mxu0 0
    %424 = vmatprep.subr.bf16.mxu0 0
    %425 = vmatpush1.bf16.msra.mxu0 0
    %426 = vmatprep.subr.bf16.mxu0 0
    %427 = vmatpush1.bf16.msra.mxu0 0
    %428 = vmatprep.mubr.bf16.mxu0 0
    %429 = vmatmul.mubr.bf16.gmra.mrb[0].mxu0 %v394
    %v430 = vpop.f32.mrb[0].mxu0
    %v431 = vadd.f32 0.0, %v430
    %v432 = vpop.f32.mrb[0].mxu0
    %v433 = vpop.f32.mrb[0].mxu0
    %v434 = vpop.f32.mrb[0].mxu0
    %435 = vdwg.mxu0
    %v436 = vadd.f32 %v136, %v431
    %v437 = vxor.u32 %v436, 2147483648
    %v438 = vmul.f32 %v437, 1.442695
    %v439 = vpow.pop %v438
    %v440 = vadd.f32 %v439, 1.0
    %v441 = vrcp.pop %v440
    %v442 = vmul.f32 1.0, %v441
    %v443 = vmul.f32 %v442, 2.0
    %v444 = vsub.f32 %v443, 1.0
    %446 = vrot.lane.b32.xlu0 %v442, 96
    %v447 = vpop.permute.xlu0 %446
    %v449 = vmul.f32 %v382, %v447
    %451 = vrot.lane.b32.xlu0 %v444, 64
    %v452 = vpop.permute.xlu0 %451
    %v454 = vmul.f32 %v442, %v452
    %v455 = vadd.f32 %v449, %v454
    %v456 = vtanh.pop %v455
    %458 = vrot.lane.b32.xlu0 %v456, 96
    %v459 = vpop.permute.xlu0 %458
    %v461 = vmul.f32 %v442, %v459
    %v462 = vpack.c.bf16 %v461, %v461
    %464 = vrot.lane.b32.xlu0 %v462, 32
    %v465 = vpop.permute.xlu0 %464
    %v467 = vsel %vm173, %v465, 0
    %469 = vmatprep.subr.bf16.mxu0 0
    %470 = vmatpush1.bf16.msra.mxu0 %v169
    %471 = vmatprep.subr.bf16.mxu0 0
    %472 = vmatpush1.bf16.msra.mxu0 %v170
    %473 = vmatprep.subr.bf16.mxu0 0
    %474 = vmatpush1.bf16.msra.mxu0 0
    %475 = vmatprep.subr.bf16.mxu0 0
    %476 = vmatpush1.bf16.msra.mxu0 0
    %477 = vmatprep.subr.bf16.mxu0 0
    %478 = vmatpush1.bf16.msra.mxu0 0
    %479 = vmatprep.subr.bf16.mxu0 0
    %480 = vmatpush1.bf16.msra.mxu0 0
    %481 = vmatprep.subr.bf16.mxu0 0
    %482 = vmatpush1.bf16.msra.mxu0 0
    %483 = vmatprep.subr.bf16.mxu0 0
    %484 = vmatpush1.bf16.msra.mxu0 0
    %485 = vmatprep.subr.bf16.mxu0 0
    %486 = vmatpush1.bf16.msra.mxu0 0
    %487 = vmatprep.subr.bf16.mxu0 0
    %488 = vmatpush1.bf16.msra.mxu0 0
    %489 = vmatprep.subr.bf16.mxu0 0
    %490 = vmatpush1.bf16.msra.mxu0 0
    %491 = vmatprep.subr.bf16.mxu0 0
    %492 = vmatpush1.bf16.msra.mxu0 0
    %493 = vmatprep.subr.bf16.mxu0 0
    %494 = vmatpush1.bf16.msra.mxu0 0
    %495 = vmatprep.subr.bf16.mxu0 0
    %496 = vmatpush1.bf16.msra.mxu0 0
    %497 = vmatprep.subr.bf16.mxu0 0
    %498 = vmatpush1.bf16.msra.mxu0 0
    %499 = vmatprep.subr.bf16.mxu0 0
    %500 = vmatpush1.bf16.msra.mxu0 0
    %501 = vmatprep.mubr.bf16.mxu0 0
    %502 = vmatmul.mubr.bf16.gmra.mrb[0].mxu0 %v467
    %v503 = vpop.f32.mrb[0].mxu0
    %v504 = vadd.f32 0.0, %v503
    %v505 = vpop.f32.mrb[0].mxu0
    %v506 = vpop.f32.mrb[0].mxu0
    %v507 = vpop.f32.mrb[0].mxu0
    %508 = vdwg.mxu0
    %v509 = vadd.f32 %v141, %v504
    %v510 = vxor.u32 %v509, 2147483648
    %v511 = vmul.f32 %v510, 1.442695
    %v512 = vpow.pop %v511
    %v513 = vadd.f32 %v512, 1.0
    %v514 = vrcp.pop %v513
    %v515 = vmul.f32 1.0, %v514
    %v516 = vmul.f32 %v515, 2.0
    %v517 = vsub.f32 %v516, 1.0
    %519 = vrot.lane.b32.xlu0 %v515, 96
    %v520 = vpop.permute.xlu0 %519
    %v522 = vmul.f32 %v455, %v520
    %524 = vrot.lane.b32.xlu0 %v517, 64
    %v525 = vpop.permute.xlu0 %524
    %v527 = vmul.f32 %v515, %v525
    %v528 = vadd.f32 %v522, %v527
    %v529 = vtanh.pop %v528
    %531 = vrot.lane.b32.xlu0 %v529, 96
    %v532 = vpop.permute.xlu0 %531
    %v534 = vmul.f32 %v515, %v532
    %v535 = vpack.c.bf16 %v534, %v534
    %537 = vrot.lane.b32.xlu0 %v535, 32
    %v538 = vpop.permute.xlu0 %537
    %v540 = vsel %vm173, %v538, 0
    %542 = vmatprep.subr.bf16.mxu0 0
    %543 = vmatpush1.bf16.msra.mxu0 %v169
    %544 = vmatprep.subr.bf16.mxu0 0
    %545 = vmatpush1.bf16.msra.mxu0 %v170
    %546 = vmatprep.subr.bf16.mxu0 0
    %547 = vmatpush1.bf16.msra.mxu0 0
    %548 = vmatprep.subr.bf16.mxu0 0
    %549 = vmatpush1.bf16.msra.mxu0 0
    %550 = vmatprep.subr.bf16.mxu0 0
    %551 = vmatpush1.bf16.msra.mxu0 0
    %552 = vmatprep.subr.bf16.mxu0 0
    %553 = vmatpush1.bf16.msra.mxu0 0
    %554 = vmatprep.subr.bf16.mxu0 0
    %555 = vmatpush1.bf16.msra.mxu0 0
    %556 = vmatprep.subr.bf16.mxu0 0
    %557 = vmatpush1.bf16.msra.mxu0 0
    %558 = vmatprep.subr.bf16.mxu0 0
    %559 = vmatpush1.bf16.msra.mxu0 0
    %560 = vmatprep.subr.bf16.mxu0 0
    %561 = vmatpush1.bf16.msra.mxu0 0
    %562 = vmatprep.subr.bf16.mxu0 0
    %563 = vmatpush1.bf16.msra.mxu0 0
    %564 = vmatprep.subr.bf16.mxu0 0
    %565 = vmatpush1.bf16.msra.mxu0 0
    %566 = vmatprep.subr.bf16.mxu0 0
    %567 = vmatpush1.bf16.msra.mxu0 0
    %568 = vmatprep.subr.bf16.mxu0 0
    %569 = vmatpush1.bf16.msra.mxu0 0
    %570 = vmatprep.subr.bf16.mxu0 0
    %571 = vmatpush1.bf16.msra.mxu0 0
    %572 = vmatprep.subr.bf16.mxu0 0
    %573 = vmatpush1.bf16.msra.mxu0 0
    %574 = vmatprep.mubr.bf16.mxu0 0
    %575 = vmatmul.mubr.bf16.gmra.mrb[0].mxu0 %v540
    %v576 = vpop.f32.mrb[0].mxu0
    %v577 = vadd.f32 0.0, %v576
    %v578 = vpop.f32.mrb[0].mxu0
    %v579 = vpop.f32.mrb[0].mxu0
    %v580 = vpop.f32.mrb[0].mxu0
    %581 = vdwg.mxu0
    %v582 = vadd.f32 %v144, %v577
    %v583 = vxor.u32 %v582, 2147483648
    %v584 = vmul.f32 %v583, 1.442695
    %v585 = vpow.pop %v584
    %v586 = vadd.f32 %v585, 1.0
    %v587 = vrcp.pop %v586
    %v588 = vmul.f32 1.0, %v587
    %v589 = vmul.f32 %v588, 2.0
    %v590 = vsub.f32 %v589, 1.0
    %592 = vrot.lane.b32.xlu0 %v588, 96
    %v593 = vpop.permute.xlu0 %592
    %v595 = vmul.f32 %v528, %v593
    %597 = vrot.lane.b32.xlu0 %v590, 64
    %v598 = vpop.permute.xlu0 %597
    %v600 = vmul.f32 %v588, %v598
    %v601 = vadd.f32 %v595, %v600
    %v602 = vtanh.pop %v601
    %604 = vrot.lane.b32.xlu0 %v602, 96
    %v605 = vpop.permute.xlu0 %604
    %v607 = vmul.f32 %v588, %v605
    %v608 = vpack.c.bf16 %v607, %v607
    %610 = vrot.lane.b32.xlu0 %v608, 32
    %v611 = vpop.permute.xlu0 %610
    %v613 = vsel %vm173, %v611, 0
    %615 = vmatprep.subr.bf16.mxu0 0
    %616 = vmatpush1.bf16.msra.mxu0 %v169
    %617 = vmatprep.subr.bf16.mxu0 0
    %618 = vmatpush1.bf16.msra.mxu0 %v170
    %619 = vmatprep.subr.bf16.mxu0 0
    %620 = vmatpush1.bf16.msra.mxu0 0
    %621 = vmatprep.subr.bf16.mxu0 0
    %622 = vmatpush1.bf16.msra.mxu0 0
    %623 = vmatprep.subr.bf16.mxu0 0
    %624 = vmatpush1.bf16.msra.mxu0 0
    %625 = vmatprep.subr.bf16.mxu0 0
    %626 = vmatpush1.bf16.msra.mxu0 0
    %627 = vmatprep.subr.bf16.mxu0 0
    %628 = vmatpush1.bf16.msra.mxu0 0
    %629 = vmatprep.subr.bf16.mxu0 0
    %630 = vmatpush1.bf16.msra.mxu0 0
    %631 = vmatprep.subr.bf16.mxu0 0
    %632 = vmatpush1.bf16.msra.mxu0 0
    %633 = vmatprep.subr.bf16.mxu0 0
    %634 = vmatpush1.bf16.msra.mxu0 0
    %635 = vmatprep.subr.bf16.mxu0 0
    %636 = vmatpush1.bf16.msra.mxu0 0
    %637 = vmatprep.subr.bf16.mxu0 0
    %638 = vmatpush1.bf16.msra.mxu0 0
    %639 = vmatprep.subr.bf16.mxu0 0
    %640 = vmatpush1.bf16.msra.mxu0 0
    %641 = vmatprep.subr.bf16.mxu0 0
    %642 = vmatpush1.bf16.msra.mxu0 0
    %643 = vmatprep.subr.bf16.mxu0 0
    %644 = vmatpush1.bf16.msra.mxu0 0
    %645 = vmatprep.subr.bf16.mxu0 0
    %646 = vmatpush1.bf16.msra.mxu0 0
    %647 = vmatprep.mubr.bf16.mxu0 0
    %648 = vmatmul.mubr.bf16.gmra.mrb[0].mxu0 %v613
    %v649 = vpop.f32.mrb[0].mxu0
    %v650 = vadd.f32 0.0, %v649
    %v651 = vpop.f32.mrb[0].mxu0
    %v652 = vpop.f32.mrb[0].mxu0
    %v653 = vpop.f32.mrb[0].mxu0
    %654 = vdwg.mxu0
    %v655 = vadd.f32 %v149, %v650
    %v656 = vxor.u32 %v655, 2147483648
    %v657 = vmul.f32 %v656, 1.442695
    %v658 = vpow.pop %v657
    %v659 = vadd.f32 %v658, 1.0
    %v660 = vrcp.pop %v659
    %v661 = vmul.f32 1.0, %v660
    %v662 = vmul.f32 %v661, 2.0
    %v663 = vsub.f32 %v662, 1.0
    %665 = vrot.lane.b32.xlu0 %v661, 96
    %v666 = vpop.permute.xlu0 %665
    %v668 = vmul.f32 %v601, %v666
    %670 = vrot.lane.b32.xlu0 %v663, 64
    %v671 = vpop.permute.xlu0 %670
    %v673 = vmul.f32 %v661, %v671
    %v674 = vadd.f32 %v668, %v673
    %v675 = vtanh.pop %v674
    %677 = vrot.lane.b32.xlu0 %v675, 96
    %v678 = vpop.permute.xlu0 %677
    %v680 = vmul.f32 %v661, %v678
    %v681 = vpack.c.bf16 %v680, %v680
    %683 = vrot.lane.b32.xlu0 %v681, 32
    %v684 = vpop.permute.xlu0 %683
    %v686 = vsel %vm173, %v684, 0
    %688 = vmatprep.subr.bf16.mxu0 0
    %689 = vmatpush1.bf16.msra.mxu0 %v169
    %690 = vmatprep.subr.bf16.mxu0 0
    %691 = vmatpush1.bf16.msra.mxu0 %v170
    %692 = vmatprep.subr.bf16.mxu0 0
    %693 = vmatpush1.bf16.msra.mxu0 0
    %694 = vmatprep.subr.bf16.mxu0 0
    %695 = vmatpush1.bf16.msra.mxu0 0
    %696 = vmatprep.subr.bf16.mxu0 0
    %697 = vmatpush1.bf16.msra.mxu0 0
    %698 = vmatprep.subr.bf16.mxu0 0
    %699 = vmatpush1.bf16.msra.mxu0 0
    %700 = vmatprep.subr.bf16.mxu0 0
    %701 = vmatpush1.bf16.msra.mxu0 0
    %702 = vmatprep.subr.bf16.mxu0 0
    %703 = vmatpush1.bf16.msra.mxu0 0
    %704 = vmatprep.subr.bf16.mxu0 0
    %705 = vmatpush1.bf16.msra.mxu0 0
    %706 = vmatprep.subr.bf16.mxu0 0
    %707 = vmatpush1.bf16.msra.mxu0 0
    %708 = vmatprep.subr.bf16.mxu0 0
    %709 = vmatpush1.bf16.msra.mxu0 0
    %710 = vmatprep.subr.bf16.mxu0 0
    %711 = vmatpush1.bf16.msra.mxu0 0
    %712 = vmatprep.subr.bf16.mxu0 0
    %713 = vmatpush1.bf16.msra.mxu0 0
    %714 = vmatprep.subr.bf16.mxu0 0
    %715 = vmatpush1.bf16.msra.mxu0 0
    %716 = vmatprep.subr.bf16.mxu0 0
    %717 = vmatpush1.bf16.msra.mxu0 0
    %718 = vmatprep.subr.bf16.mxu0 0
    %719 = vmatpush1.bf16.msra.mxu0 0
    %720 = vmatprep.mubr.bf16.mxu0 0
    %721 = vmatmul.mubr.bf16.gmra.mrb[0].mxu0 %v686
    %v722 = vpop.f32.mrb[0].mxu0
    %v723 = vadd.f32 0.0, %v722
    %v724 = vpop.f32.mrb[0].mxu0
    %v725 = vpop.f32.mrb[0].mxu0
    %v726 = vpop.f32.mrb[0].mxu0
    %727 = vdwg.mxu0
    %v728 = vadd.f32 %v152, %v723
    %v729 = vxor.u32 %v728, 2147483648
    %v730 = vmul.f32 %v729, 1.442695
    %v731 = vpow.pop %v730
    %v732 = vadd.f32 %v731, 1.0
    %v733 = vrcp.pop %v732
    %v734 = vmul.f32 1.0, %v733
    %v735 = vmul.f32 %v734, 2.0
    %v736 = vsub.f32 %v735, 1.0
    %738 = vrot.lane.b32.xlu0 %v734, 96
    %v739 = vpop.permute.xlu0 %738
    %v741 = vmul.f32 %v674, %v739
    %743 = vrot.lane.b32.xlu0 %v736, 64
    %v744 = vpop.permute.xlu0 %743
    %v746 = vmul.f32 %v734, %v744
    %v747 = vadd.f32 %v741, %v746
    %v748 = vtanh.pop %v747
    %750 = vrot.lane.b32.xlu0 %v748, 96
    %v751 = vpop.permute.xlu0 %750
    %v753 = vmul.f32 %v734, %v751
    %v754 = vld [vmem:[%s4] sm:$0xff]
    %v755 = vld [vmem:[%s4 + $0x8] sm:$0xff]
    %v756 = vld [vmem:[%s4 + $0x10] sm:$0xff]
    %v757 = vld [vmem:[%s4 + $0x18] sm:$0xff]
    %v758 = vld [vmem:[%s4 + $0x20] sm:$0x1]
    %v759 = vlaneseq
    %v760 = vshrl.u32 %v759, 7
    %v761 = vsub.s32 0, %v760
    %v762 = vrot.slane %v758, %v761
    %764 = vrot.lane.b32.xlu0 %v753, 32
    %v765 = vpop.permute.xlu0 %764
    %v766 = vsel %vm173, %v765, 0
    %768 = vmatprep.subr.mxu0 0.0
    %769 = vmatpush1.msra.mxu0 %v754
    %770 = vmatprep.subr.mxu0 0.0
    %771 = vmatpush1.msra.mxu0 %v755
    %772 = vmatprep.subr.mxu0 0.0
    %773 = vmatpush1.msra.mxu0 %v756
    %774 = vmatprep.subr.mxu0 0.0
    %775 = vmatpush1.msra.mxu0 %v757
    %776 = vmatprep.subr.mxu0 0.0
    %777 = vmatpush1.msra.mxu0 0.0
    %778 = vmatprep.subr.mxu0 0.0
    %779 = vmatpush1.msra.mxu0 0.0
    %780 = vmatprep.subr.mxu0 0.0
    %781 = vmatpush1.msra.mxu0 0.0
    %782 = vmatprep.subr.mxu0 0.0
    %783 = vmatpush1.msra.mxu0 0.0
    %784 = vmatprep.subr.mxu0 0.0
    %785 = vmatpush1.msra.mxu0 0.0
    %786 = vmatprep.subr.mxu0 0.0
    %787 = vmatpush1.msra.mxu0 0.0
    %788 = vmatprep.subr.mxu0 0.0
    %789 = vmatpush1.msra.mxu0 0.0
    %790 = vmatprep.subr.mxu0 0.0
    %791 = vmatpush1.msra.mxu0 0.0
    %792 = vmatprep.subr.mxu0 0.0
    %793 = vmatpush1.msra.mxu0 0.0
    %794 = vmatprep.subr.mxu0 0.0
    %795 = vmatpush1.msra.mxu0 0.0
    %796 = vmatprep.subr.mxu0 0.0
    %797 = vmatpush1.msra.mxu0 0.0
    %798 = vmatprep.subr.mxu0 0.0
    %799 = vmatpush1.msra.mxu0 0.0
    %800 = vmatprep.subr.mxu0 0.0
    %801 = vmatpush1.msra.mxu0 0.0
    %802 = vmatprep.subr.mxu0 0.0
    %803 = vmatpush1.msra.mxu0 0.0
    %804 = vmatprep.subr.mxu0 0.0
    %805 = vmatpush1.msra.mxu0 0.0
    %806 = vmatprep.subr.mxu0 0.0
    %807 = vmatpush1.msra.mxu0 0.0
    %808 = vmatprep.subr.mxu0 0.0
    %809 = vmatpush1.msra.mxu0 0.0
    %810 = vmatprep.subr.mxu0 0.0
    %811 = vmatpush1.msra.mxu0 0.0
    %812 = vmatprep.subr.mxu0 0.0
    %813 = vmatpush1.msra.mxu0 0.0
    %814 = vmatprep.subr.mxu0 0.0
    %815 = vmatpush1.msra.mxu0 0.0
    %816 = vmatprep.subr.mxu0 0.0
    %817 = vmatpush1.msra.mxu0 0.0
    %818 = vmatprep.subr.mxu0 0.0
    %819 = vmatpush1.msra.mxu0 0.0
    %820 = vmatprep.subr.mxu0 0.0
    %821 = vmatpush1.msra.mxu0 0.0
    %822 = vmatprep.subr.mxu0 0.0
    %823 = vmatpush1.msra.mxu0 0.0
    %824 = vmatprep.subr.mxu0 0.0
    %825 = vmatpush1.msra.mxu0 0.0
    %826 = vmatprep.subr.mxu0 0.0
    %827 = vmatpush1.msra.mxu0 0.0
    %828 = vmatprep.subr.mxu0 0.0
    %829 = vmatpush1.msra.mxu0 0.0
    %830 = vmatprep.subr.mxu0 0.0
    %831 = vmatpush1.msra.mxu0 0.0
    %832 = vmatprep.mubr.f32.mxu0 0.0
    %833 = vmatmul.mubr.f32.gmra.mrb[0].mxu0 %v766
    %v834 = vpop.f32.mrb[0].mxu0
    %v835 = vadd.f32 %v762, %v834
    %v836 = vpop.f32.mrb[0].mxu0
    %837 = vdwg.mxu0
    %vm838 = vcmask 130048
    %v839 = vsel %vm838, %v835, -inf
    %840 = vmax.xlane.f32.xlu0 %v839
    %v841 = vpop.xlane.xlu0 %840
    %v842 = vsub.f32 %v835, %v841
    %v843 = vmul.f32 %v842, 1.442695
    %v844 = vpow.pop %v843
    %v845 = vsel %vm838, %v844, 0.0
    %846 = vadd.xlane.f32.xlu0 %v845
    %v847 = vpop.xlane.xlu0 %846
    %v848 = vrcp.pop %v847
    %v849 = vmul.f32 %v844, %v848
    %850 = vst.msk [vmem:[#allocation2] sm:$0xff] %vm838, %v849
    %852 = vst.msk [vmem:[#allocation4] sm:$0xff] %vm173, %v765
    // Predicated region
    $region22: #{lstm_forward.1} parent=1 // pred_check
      _
    $region23: #{lstm_forward.1} parent=1 // pred_check_branch
      %854 = sbr.rel (0) target = $region25
    $region24: #{lstm_forward.1} parent=1 // pred_region
      %s856 = ssub.s32 128, 128
      %857 = vsyncadd [#allocation3], %s856
      %s859 = sshll.u32 [#allocation2], 4
      %s860 = int_to_ptr.vmem [resolvable:$true] %s859
      %862 = dma.vmem_to_hbm [thread:$0]  %s860, 128, %s5, [#allocation3]
    $region25: #{lstm_forward.1} parent=1 // pred_fallthru
      _
    // Predicated region
    $region26: #{lstm_forward.1} parent=1 // pred_check
      _
    $region27: #{lstm_forward.1} parent=1 // pred_check_branch
      %864 = sbr.rel (0) target = $region29
    $region28: #{lstm_forward.1} parent=1 // pred_region
      %s866 = ssub.s32 128, 128
      %867 = vsyncadd [#allocation5], %s866
      %s869 = sshll.u32 [#allocation4], 4
      %s870 = int_to_ptr.vmem [resolvable:$true] %s869
      %872 = dma.vmem_to_hbm [thread:$0]  %s870, 128, %s6, [#allocation5]
    $region29: #{lstm_forward.1} parent=1 // pred_fallthru
      _
    // Predicated region
    $region30: #{lstm_forward.1} parent=1 // pred_check
      _
    $region31: #{lstm_forward.1} parent=1 // pred_check_branch
      %874 = sbr.rel (0) target = $region33
    $region32: #{lstm_forward.1} parent=1 // pred_region
      %875 = dma.done [#allocation3], 128
    $region33: #{lstm_forward.1} parent=1 // pred_fallthru
      _
    // Predicated region
    $region34: #{lstm_forward.1} parent=1 // pred_check
      _
    $region35: #{lstm_forward.1} parent=1 // pred_check_branch
      %877 = sbr.rel (0) target = $region37
    $region36: #{lstm_forward.1} parent=1 // pred_region
      %878 = dma.done [#allocation5], 128
    $region37: #{lstm_forward.1} parent=1 // pred_fallthru
      _
    %879 = vsyncpa [#allocation3], 1
    %880 = vsyncpa [#allocation5], 1

</llo_original>
